<compile_context>
chip_gen: v7x
topology: tpu7x:2x2x1
jax: 0.10.0
libtpu: 0.0.40
codegen_flags: <defaults>
</compile_context>

<pallas_src>
import functools

import jax
import jax.numpy as jnp
from jax.experimental import pallas as pl
from jax.experimental.pallas import tpu as pltpu

EPS = 1e-5
H1 = 512
H2 = 14
LANE = 128
SUBLANE = 8
BF16_ROWS = 16          # bf16 sublane packing granularity for batch tiles


def _round_up(n, m):
    return (n + m - 1) // m * m


def _vmem_budget_bytes():
    """Generation-aware scoped-VMEM budget (leaves headroom for the compiler)."""
    try:
        cap = int(pltpu.get_tpu_info().vmem_capacity_bytes)
    except Exception:                       # not a TPU / API unavailable
        cap = 64 * 1024 * 1024
    # v5e/v6e (128 MiB) -> 96 MiB; v7x (64 MiB) -> 48 MiB.
    return min(cap - (16 << 20), int(cap * 0.75))


def _full_spec(shape):
    n = len(shape)
    return pl.BlockSpec(shape, lambda i: (0,) * n)


def _const_spec(shape, single):
    """Grid-invariant operand; single-buffered when `single` to save VMEM."""
    n = len(shape)
    if single:
        return pl.BlockSpec(shape, lambda i: (0,) * n,
                            pipeline_mode=pl.Buffered(1))
    return pl.BlockSpec(shape, lambda i: (0,) * n)


def _call(builder, args):
    """Try the single-buffered-weights variant; fall back if unsupported."""
    try:
        return builder(True)(*args)
    except Exception:
        return builder(False)(*args)


# ---------------------------------------------------------------------------
# Shared MLP body: 3 matmuls (bf16 operands, f32 MXU accumulation) + ReLUs.
# ---------------------------------------------------------------------------
def _mlp_body(x_bf16, w1, b1, w2, b2, w3, b3, out_dtype):
    h1 = jnp.dot(x_bf16, w1, preferred_element_type=jnp.float32)
    h1 = jnp.maximum(h1 + b1, 0.0)
    h2 = jnp.dot(h1.astype(jnp.bfloat16), w2, preferred_element_type=jnp.float32)
    h2 = jnp.maximum(h2 + b2, 0.0)
    h3 = jnp.dot(h2.astype(jnp.bfloat16), w3, preferred_element_type=jnp.float32)
    return (h3 + b3).astype(out_dtype)


# ---------------------------------------------------------------------------
# Fused single-launch kernel (small batches): BN stats + BN affine + MLP.
# ---------------------------------------------------------------------------
def fused_kernel(x_ref, gamma_ref, beta_ref,
                 w1_ref, b1_ref, w2_ref, b2_ref, w3_ref, b3_ref,
                 out_ref, *, rows, inv_b):
    x = x_ref[...].astype(jnp.float32)                       # (Bp, D)
    # Mask zero-padded batch rows out of the variance (two-pass, centered).
    valid = (jax.lax.broadcasted_iota(jnp.int32, x.shape, 0) < rows)
    valid = valid.astype(jnp.float32)
    mean = jnp.sum(x, axis=0, keepdims=True) * inv_b         # padded rows are 0
    cent = (x - mean) * valid
    var = jnp.sum(cent * cent, axis=0, keepdims=True) * inv_b
    inv_std = jax.lax.rsqrt(var + EPS)                        # EUP slot
    scale = gamma_ref[...] * inv_std
    shift = beta_ref[...] - mean * scale
    x_bn = (x * scale + shift).astype(jnp.bfloat16)
    out_ref[...] = _mlp_body(x_bn, w1_ref[...], b1_ref[...], w2_ref[...],
                             b2_ref[...], w3_ref[...], b3_ref[...],
                             out_ref.dtype)


# ---------------------------------------------------------------------------
# Pass 1 (tiled path): training-mode BatchNorm statistics -> scale/shift.
# Reduction over batch tiles; accumulators live in VMEM scratch and the
# outputs are written once at the last grid step.
# ---------------------------------------------------------------------------
def bn_stats_kernel(x_ref, gamma_ref, beta_ref, scale_ref, shift_ref,
                    sum_acc, sq_acc, *, inv_b):
    step = pl.program_id(0)

    @pl.when(step == 0)
    def _():
        sum_acc[...] = jnp.zeros_like(sum_acc)
        sq_acc[...] = jnp.zeros_like(sq_acc)

    x = x_ref[...].astype(jnp.float32)                       # (TB, D), x is bf16
    # Zero-padded batch rows contribute 0 to both sums, so padding is safe.
    sum_acc[...] += jnp.sum(x, axis=0, keepdims=True)        # (1, D)
    sq_acc[...] += jnp.sum(x * x, axis=0, keepdims=True)     # (1, D)

    @pl.when(step == pl.num_programs(0) - 1)
    def _():
        mean = sum_acc[...] * inv_b
        # E[x^2]-E[x]^2 in f32 (biased var); assumes |mean| not >> std.
        var = jnp.maximum(sq_acc[...] * inv_b - mean * mean, 0.0)
        inv_std = jax.lax.rsqrt(var + EPS)
        scale = gamma_ref[...] * inv_std
        scale_ref[...] = scale
        shift_ref[...] = beta_ref[...] - mean * scale


# ---------------------------------------------------------------------------
# Pass 2 (tiled path): BN already folded into (w1_eff, b1_eff); pure MLP.
# ---------------------------------------------------------------------------
def mlp_kernel(x_ref, w1_ref, b1_ref, w2_ref, b2_ref, w3_ref, b3_ref, out_ref):
    out_ref[...] = _mlp_body(x_ref[...], w1_ref[...], b1_ref[...], w2_ref[...],
                             b2_ref[...], w3_ref[...], b3_ref[...],
                             out_ref.dtype)


# ---------------------------------------------------------------------------
# Host-side wrappers
# ---------------------------------------------------------------------------
def prepare_params(params):
    """One-time param prep: pad narrow dims to 128 lanes, weights -> bf16."""
    gamma, beta, w1, b1, w2, b2, w3, b3 = params
    h2p = _round_up(w2.shape[1], LANE)           # 14 -> 128
    op = _round_up(w3.shape[1], LANE)            # O  -> 128
    w2p = jnp.pad(w2, ((0, 0), (0, h2p - w2.shape[1])))
    b2p = jnp.pad(b2, ((0, 0), (0, h2p - b2.shape[1])))
    w3p = jnp.pad(w3, ((0, h2p - w3.shape[0]), (0, op - w3.shape[1])))
    b3p = jnp.pad(b3, ((0, 0), (0, op - b3.shape[1])))
    return (gamma.astype(jnp.float32), beta.astype(jnp.float32),
            w1.astype(jnp.bfloat16), b1.astype(jnp.float32),
            w2p.astype(jnp.bfloat16), b2p.astype(jnp.float32),
            w3p.astype(jnp.bfloat16), b3p.astype(jnp.float32))


def _weight_bytes(D, h1, h2p, op):
    return (D * h1 + h1 * h2p + h2p * op) * 2 + (h1 + h2p + op) * 4


def _pick_tile_b(B, D, vmem_cap, weight_bytes):
    """Largest bf16-packed batch tile that fits the VMEM budget (<=1024 rows)."""
    # Per-row live bytes in pass 2: double-buffered bf16 x tile, double-buffered
    # bf16 out slab, f32+bf16 copies of the h1/h2/h3 intermediates.
    per_row = 2 * D * 2 + 2 * LANE * 2 + H1 * 6 + LANE * 6 + LANE * 4
    fixed = 2 * weight_bytes + (8 << 20)   # conservative (double-buffered weights)
    tile = (vmem_cap - fixed) // per_row
    tile = (int(tile) // BF16_ROWS) * BF16_ROWS
    tile = max(BF16_ROWS, min(1024, tile))
    return min(tile, _round_up(B, BF16_ROWS))


def _fused_forward(x, prepared, output_dim, vmem_cap):
    gamma, beta, w1, b1, w2p, b2p, w3p, b3p = prepared
    B, D = x.shape
    h1, h2p, op = w1.shape[1], w2p.shape[1], w3p.shape[1]
    rows = _round_up(max(B, SUBLANE), SUBLANE)
    x_p = jnp.pad(x, ((0, rows - B), (0, 0))) if rows != B else x
    wb = _weight_bytes(D, h1, h2p, op)

    cost = pl.CostEstimate(
        flops=int(2 * rows * (D * h1 + h1 * h2p + h2p * op) + 8 * rows * D),
        transcendentals=int(D),
        bytes_accessed=int(rows * D * 4 + wb + rows * op * 2))

    out = pl.pallas_call(
        functools.partial(fused_kernel, rows=B, inv_b=1.0 / B),
        out_shape=jax.ShapeDtypeStruct((rows, op), jnp.bfloat16),
        grid=(1,),
        in_specs=[_full_spec((rows, D)), _full_spec((1, D)), _full_spec((1, D)),
                  _full_spec((D, h1)), _full_spec((1, h1)),
                  _full_spec((h1, h2p)), _full_spec((1, h2p)),
                  _full_spec((h2p, op)), _full_spec((1, op))],
        out_specs=_full_spec((rows, op)),
        compiler_params=pltpu.CompilerParams(
            dimension_semantics=("arbitrary",),
            vmem_limit_bytes=vmem_cap),
        cost_estimate=cost,
    )(x_p, gamma, beta, w1, b1, w2p, b2p, w3p, b3p)
    return out[:B, :output_dim].astype(jnp.float32)


def mlp_2hidden_forward(x, prepared, output_dim, tile_b=None):
    gamma, beta, w1, b1, w2p, b2p, w3p, b3p = prepared
    B, D = x.shape
    h1, h2p, op = w1.shape[1], w2p.shape[1], w3p.shape[1]
    vmem_cap = _vmem_budget_bytes()
    wb = _weight_bytes(D, h1, h2p, op)

    # ---- small-batch fast path: one fused launch ----
    if tile_b is None:
        rows_f = _round_up(max(B, SUBLANE), SUBLANE)
        per_row_f = 16 * D + 6 * h1 + 8 * op   # rough live f32/bf16 bytes / row
        if rows_f <= 1024 and rows_f * per_row_f + 2 * wb + (8 << 20) <= vmem_cap:
            return _fused_forward(x, prepared, output_dim, vmem_cap)
        tile_b = _pick_tile_b(B, D, vmem_cap, wb)

    # ---- two-pass tiled path ----
    tile_b = max(BF16_ROWS, _round_up(tile_b, BF16_ROWS))
    b_pad = _round_up(B, tile_b)
    x_bf = x.astype(jnp.bfloat16)            # x is read by both passes: halve DMA
    x_p = jnp.pad(x_bf, ((0, b_pad - B), (0, 0))) if b_pad != B else x_bf
    n_tiles = b_pad // tile_b

    # ---- pass 1: batch statistics (sequential reduction grid) ----
    def build_stats(single):
        const = functools.partial(_const_spec, single=single)
        return pl.pallas_call(
            functools.partial(bn_stats_kernel, inv_b=1.0 / B),
            out_shape=(jax.ShapeDtypeStruct((1, D), jnp.float32),
                       jax.ShapeDtypeStruct((1, D), jnp.float32)),
            grid=(n_tiles,),
            in_specs=[pl.BlockSpec((tile_b, D), lambda i: (i, 0)),
                      const((1, D)), const((1, D))],
            out_specs=(pl.BlockSpec((1, D), lambda i: (0, 0)),
                       pl.BlockSpec((1, D), lambda i: (0, 0))),
            scratch_shapes=[pltpu.VMEM((1, D), jnp.float32),
                            pltpu.VMEM((1, D), jnp.float32)],
            compiler_params=pltpu.CompilerParams(
                dimension_semantics=("arbitrary",),
                vmem_limit_bytes=vmem_cap),
            cost_estimate=pl.CostEstimate(
                flops=int(4 * b_pad * D), transcendentals=int(D),
                bytes_accessed=int(b_pad * D * 2 + 4 * D * 4)),
        )

    scale, shift = _call(build_stats, (x_p, gamma, beta))

    # ---- fold BN affine into the first Linear (tiny XLA ops) ----
    # (x*scale + shift) @ w1 + b1 == x @ (scale^T * w1) + (shift @ w1 + b1)
    w1f = w1.astype(jnp.float32)
    w1_eff = (w1f * jnp.reshape(scale, (D, 1))).astype(jnp.bfloat16)
    b1_eff = shift @ w1f + b1

    # ---- pass 2: batch-tiled MLP, lane-dense bf16 output slab ----
    def build_mlp(single):
        const = functools.partial(_const_spec, single=single)
        return pl.pallas_call(
            mlp_kernel,
            out_shape=jax.ShapeDtypeStruct((b_pad, op), jnp.bfloat16),
            grid=(n_tiles,),
            in_specs=[
                pl.BlockSpec((tile_b, D), lambda i: (i, 0)),   # x tile (bf16)
                const((D, h1)), const((1, h1)),                # w1_eff, b1_eff
                const((h1, h2p)), const((1, h2p)),             # w2 padded, b2
                const((h2p, op)), const((1, op)),              # w3 padded, b3
            ],
            out_specs=pl.BlockSpec((tile_b, op), lambda i: (i, 0)),
            compiler_params=pltpu.CompilerParams(
                dimension_semantics=("parallel",),   # shards across v7x's 2 TCs
                vmem_limit_bytes=vmem_cap),
            cost_estimate=pl.CostEstimate(
                flops=int(2 * b_pad * (D * h1 + h1 * h2p + h2p * op)),
                transcendentals=0,
                bytes_accessed=int(b_pad * D * 2 + wb + b_pad * op * 2)),
        )

    out_padded = _call(build_mlp, (x_p, w1_eff, b1_eff, w2p, b2p, w3p, b3p))
    return out_padded[:B, :output_dim].astype(jnp.float32)


def init_params(key, input_dim, output_dim):
    """Deterministic init mimicking PyTorch defaults (shapes are what matter)."""
    ks = jax.random.split(key, 6)

    def linear_init(kw, kb, fan_in, fan_out):
        bound = 1.0 / (fan_in ** 0.5)
        w = jax.random.uniform(kw, (fan_in, fan_out), jnp.float32, -bound, bound)
        b = jax.random.uniform(kb, (1, fan_out), jnp.float32, -bound, bound)
        return w, b

    gamma = jnp.ones((1, input_dim), jnp.float32)   # BatchNorm1d weight
    beta = jnp.zeros((1, input_dim), jnp.float32)   # BatchNorm1d bias
    w1, b1 = linear_init(ks[0], ks[1], input_dim, H1)
    w2, b2 = linear_init(ks[2], ks[3], H1, H2)
    w3, b3 = linear_init(ks[4], ks[5], H2, output_dim)
    return gamma, beta, w1, b1, w2, b2, w3, b3


if __name__ == "__main__":
    key = jax.random.PRNGKey(0)
    k_x, k_p = jax.random.split(key)

    batch = 52          # deliberately not tile-aligned to exercise padding
    input_dim = 32
    output_dim = 10

    x = jax.random.normal(k_x, (batch, input_dim), jnp.float32)
    params = init_params(k_p, input_dim, output_dim)
    prepared = prepare_params(params)

    # Pure-JAX f32 reference of the same math (training-mode BatchNorm).
    gamma, beta, w1, b1, w2, b2, w3, b3 = params
    mean = jnp.mean(x, axis=0, keepdims=True)
    var = jnp.mean((x - mean) ** 2, axis=0, keepdims=True)
    x_bn = (x - mean) / jnp.sqrt(var + EPS) * gamma + beta
    ref = jnp.maximum(x_bn @ w1 + b1, 0.0)
    ref = jnp.maximum(ref @ w2 + b2, 0.0)
    ref = ref @ w3 + b3

    # 1) default: small batch -> single fused launch
    out = mlp_2hidden_forward(x, prepared, output_dim)
    jax.block_until_ready(out)
    assert out.shape == (batch, output_dim)
    # bf16 operands with f32 accumulation -> loosened tolerance.
    assert jnp.allclose(out, ref, atol=5e-2, rtol=5e-2), \
        float(jnp.max(jnp.abs(out - ref)))

    # 2) forced multi-tile grid: exercises the batch-tiled stats reduction,
    #    the host-side BN fold, the "parallel" batch grid, the single-buffered
    #    weight specs, and the padded-row / bf16-slab output path.
    out_tiled = mlp_2hidden_forward(x, prepared, output_dim, tile_b=16)
    jax.block_until_ready(out_tiled)
    assert jnp.allclose(out_tiled, ref, atol=5e-2, rtol=5e-2), \
        float(jnp.max(jnp.abs(out_tiled - ref)))

    print("KERNEL_OK")
</pallas_src>

<mosaic_0001>
module attributes {stable_mosaic.version = 11 : i64} {
  func.func @fused_kernel(%arg0: i32, %arg1: memref<56x32xf32, #tpu.memory_space<vmem>>, %arg2: memref<1x32xf32, #tpu.memory_space<vmem>>, %arg3: memref<1x32xf32, #tpu.memory_space<vmem>>, %arg4: memref<32x512xbf16, #tpu.memory_space<vmem>>, %arg5: memref<1x512xf32, #tpu.memory_space<vmem>>, %arg6: memref<512x128xbf16, #tpu.memory_space<vmem>>, %arg7: memref<1x128xf32, #tpu.memory_space<vmem>>, %arg8: memref<128x128xbf16, #tpu.memory_space<vmem>>, %arg9: memref<1x128xf32, #tpu.memory_space<vmem>>, %arg10: memref<56x128xbf16, #tpu.memory_space<vmem>>) attributes {dimension_semantics = [#tpu.dimension_semantics<arbitrary>], iteration_bounds = array<i64: 1>, scalar_prefetch = 0 : i64, scratch_operands = 0 : i64, tpu.core_type = #tpu.core_type<tc>, window_params = [{pipeline_mode = #tpu.pipeline_mode<synchronous>, transform_indices = @transform_0, window_bounds = array<i64: 56, 32>}, {pipeline_mode = #tpu.pipeline_mode<synchronous>, transform_indices = @transform_1, window_bounds = array<i64: 1, 32>}, {pipeline_mode = #tpu.pipeline_mode<synchronous>, transform_indices = @transform_2, window_bounds = array<i64: 1, 32>}, {pipeline_mode = #tpu.pipeline_mode<synchronous>, transform_indices = @transform_3, window_bounds = array<i64: 32, 512>}, {pipeline_mode = #tpu.pipeline_mode<synchronous>, transform_indices = @transform_4, window_bounds = array<i64: 1, 512>}, {pipeline_mode = #tpu.pipeline_mode<synchronous>, transform_indices = @transform_5, window_bounds = array<i64: 512, 128>}, {pipeline_mode = #tpu.pipeline_mode<synchronous>, transform_indices = @transform_6, window_bounds = array<i64: 1, 128>}, {pipeline_mode = #tpu.pipeline_mode<synchronous>, transform_indices = @transform_7, window_bounds = array<i64: 128, 128>}, {pipeline_mode = #tpu.pipeline_mode<synchronous>, transform_indices = @transform_8, window_bounds = array<i64: 1, 128>}, {pipeline_mode = #tpu.pipeline_mode<synchronous>, transform_indices = @transform_9, window_bounds = array<i64: 56, 128>}]} {
    %c0 = arith.constant 0 : index
    %c0_0 = arith.constant 0 : index
    %0 = vector.load %arg1[%c0, %c0_0] : memref<56x32xf32, #tpu.memory_space<vmem>>, vector<56x32xf32>
    %1 = tpu.iota {dimensions = array<i32: 0>} : vector<56x32xi32>
    %c52_i32 = arith.constant 52 : i32
    %2 = vector.broadcast %c52_i32 : i32 to vector<56x32xi32>
    %3 = arith.cmpi slt, %1, %2 : vector<56x32xi32>
    %4 = arith.extui %3 : vector<56x32xi1> to vector<56x32xi32>
    %5 = arith.sitofp %4 : vector<56x32xi32> to vector<56x32xf32>
    %cst = arith.constant dense<0.000000e+00> : vector<32xf32>
    %6 = vector.multi_reduction <add>, %0, %cst [0] : vector<56x32xf32> to vector<32xf32>
    %7 = vector.shape_cast %6 : vector<32xf32> to vector<1x32xf32>
    %cst_1 = arith.constant 0.0192307699 : f32
    %8 = vector.broadcast %cst_1 : f32 to vector<1x32xf32>
    %9 = arith.mulf %7, %8 : vector<1x32xf32>
    %10 = vector.broadcast %9 : vector<1x32xf32> to vector<56x32xf32>
    %11 = arith.subf %0, %10 : vector<56x32xf32>
    %12 = arith.mulf %11, %5 : vector<56x32xf32>
    %13 = arith.mulf %12, %12 : vector<56x32xf32>
    %cst_2 = arith.constant dense<0.000000e+00> : vector<32xf32>
    %14 = vector.multi_reduction <add>, %13, %cst_2 [0] : vector<56x32xf32> to vector<32xf32>
    %15 = vector.shape_cast %14 : vector<32xf32> to vector<1x32xf32>
    %cst_3 = arith.constant 0.0192307699 : f32
    %16 = vector.broadcast %cst_3 : f32 to vector<1x32xf32>
    %17 = arith.mulf %15, %16 : vector<1x32xf32>
    %cst_4 = arith.constant 9.99999974E-6 : f32
    %18 = vector.broadcast %cst_4 : f32 to vector<1x32xf32>
    %19 = arith.addf %17, %18 : vector<1x32xf32>
    %20 = math.rsqrt %19 : vector<1x32xf32>
    %c0_5 = arith.constant 0 : index
    %c0_6 = arith.constant 0 : index
    %21 = vector.load %arg2[%c0_5, %c0_6] : memref<1x32xf32, #tpu.memory_space<vmem>>, vector<1x32xf32>
    %22 = arith.mulf %21, %20 : vector<1x32xf32>
    %c0_7 = arith.constant 0 : index
    %c0_8 = arith.constant 0 : index
    %23 = vector.load %arg3[%c0_7, %c0_8] : memref<1x32xf32, #tpu.memory_space<vmem>>, vector<1x32xf32>
    %24 = arith.mulf %9, %22 : vector<1x32xf32>
    %25 = arith.subf %23, %24 : vector<1x32xf32>
    %26 = vector.broadcast %22 : vector<1x32xf32> to vector<56x32xf32>
    %27 = arith.mulf %0, %26 : vector<56x32xf32>
    %28 = vector.broadcast %25 : vector<1x32xf32> to vector<56x32xf32>
    %29 = arith.addf %27, %28 : vector<56x32xf32>
    %30 = arith.truncf %29 : vector<56x32xf32> to vector<56x32xbf16>
    %c0_9 = arith.constant 0 : index
    %c0_10 = arith.constant 0 : index
    %31 = vector.load %arg4[%c0_9, %c0_10] : memref<32x512xbf16, #tpu.memory_space<vmem>>, vector<32x512xbf16>
    %c0_11 = arith.constant 0 : index
    %c0_12 = arith.constant 0 : index
    %32 = vector.load %arg5[%c0_11, %c0_12] : memref<1x512xf32, #tpu.memory_space<vmem>>, vector<1x512xf32>
    %c0_13 = arith.constant 0 : index
    %c0_14 = arith.constant 0 : index
    %33 = vector.load %arg6[%c0_13, %c0_14] : memref<512x128xbf16, #tpu.memory_space<vmem>>, vector<512x128xbf16>
    %c0_15 = arith.constant 0 : index
    %c0_16 = arith.constant 0 : index
    %34 = vector.load %arg7[%c0_15, %c0_16] : memref<1x128xf32, #tpu.memory_space<vmem>>, vector<1x128xf32>
    %c0_17 = arith.constant 0 : index
    %c0_18 = arith.constant 0 : index
    %35 = vector.load %arg8[%c0_17, %c0_18] : memref<128x128xbf16, #tpu.memory_space<vmem>>, vector<128x128xbf16>
    %c0_19 = arith.constant 0 : index
    %c0_20 = arith.constant 0 : index
    %36 = vector.load %arg9[%c0_19, %c0_20] : memref<1x128xf32, #tpu.memory_space<vmem>>, vector<1x128xf32>
    %cst_21 = arith.constant dense<0.000000e+00> : vector<56x512xf32>
    %37 = tpu.matmul %30, %31, %cst_21 {dimension_numbers = #tpu.dot_dimension_numbers<[1], [0], [0], [1], [0, 0, 1, 1], [], []>} : vector<56x32xbf16>, vector<32x512xbf16>, vector<56x512xf32> -> vector<56x512xf32>
    %38 = vector.broadcast %32 : vector<1x512xf32> to vector<56x512xf32>
    %39 = arith.addf %37, %38 : vector<56x512xf32>
    %cst_22 = arith.constant 0.000000e+00 : f32
    %40 = vector.broadcast %cst_22 : f32 to vector<56x512xf32>
    %41 = arith.maximumf %39, %40 : vector<56x512xf32>
    %42 = arith.truncf %41 : vector<56x512xf32> to vector<56x512xbf16>
    %cst_23 = arith.constant dense<0.000000e+00> : vector<56x128xf32>
    %43 = tpu.matmul %42, %33, %cst_23 {dimension_numbers = #tpu.dot_dimension_numbers<[1], [0], [0], [1], [0, 0, 1, 1], [], []>} : vector<56x512xbf16>, vector<512x128xbf16>, vector<56x128xf32> -> vector<56x128xf32>
    %44 = vector.broadcast %34 : vector<1x128xf32> to vector<56x128xf32>
    %45 = arith.addf %43, %44 : vector<56x128xf32>
    %cst_24 = arith.constant 0.000000e+00 : f32
    %46 = vector.broadcast %cst_24 : f32 to vector<56x128xf32>
    %47 = arith.maximumf %45, %46 : vector<56x128xf32>
    %48 = arith.truncf %47 : vector<56x128xf32> to vector<56x128xbf16>
    %cst_25 = arith.constant dense<0.000000e+00> : vector<56x128xf32>
    %49 = tpu.matmul %48, %35, %cst_25 {dimension_numbers = #tpu.dot_dimension_numbers<[1], [0], [0], [1], [0, 0, 1, 1], [], []>} : vector<56x128xbf16>, vector<128x128xbf16>, vector<56x128xf32> -> vector<56x128xf32>
    %50 = vector.broadcast %36 : vector<1x128xf32> to vector<56x128xf32>
    %51 = arith.addf %49, %50 : vector<56x128xf32>
    %52 = arith.truncf %51 : vector<56x128xf32> to vector<56x128xbf16>
    %c0_26 = arith.constant 0 : index
    %c0_27 = arith.constant 0 : index
    %53 = vector.load %arg10[%c0_26, %c0_27] : memref<56x128xbf16, #tpu.memory_space<vmem>>, vector<56x128xbf16>
    tpu.vector_store %arg10[%c0_26, %c0_27], %52 {strides = array<i32>} : memref<56x128xbf16, #tpu.memory_space<vmem>>, vector<56x128xbf16>,
    return
  }
  func.func @transform_0(%arg0: i32) -> (i32, i32) {
    %c0_i32 = arith.constant 0 : i32
    %c0_i32_0 = arith.constant 0 : i32
    %c0_i32_1 = arith.constant 0 : i32
    return %c0_i32, %c0_i32_0 : i32, i32
  }
  func.func @transform_1(%arg0: i32) -> (i32, i32) {
    %c0_i32 = arith.constant 0 : i32
    %c0_i32_0 = arith.constant 0 : i32
    %c0_i32_1 = arith.constant 0 : i32
    return %c0_i32, %c0_i32_0 : i32, i32
  }
  func.func @transform_2(%arg0: i32) -> (i32, i32) {
    %c0_i32 = arith.constant 0 : i32
    %c0_i32_0 = arith.constant 0 : i32
    %c0_i32_1 = arith.constant 0 : i32
    return %c0_i32, %c0_i32_0 : i32, i32
  }
  func.func @transform_3(%arg0: i32) -> (i32, i32) {
    %c0_i32 = arith.constant 0 : i32
    %c0_i32_0 = arith.constant 0 : i32
    %c0_i32_1 = arith.constant 0 : i32
    return %c0_i32, %c0_i32_0 : i32, i32
  }
  func.func @transform_4(%arg0: i32) -> (i32, i32) {
    %c0_i32 = arith.constant 0 : i32
    %c0_i32_0 = arith.constant 0 : i32
    %c0_i32_1 = arith.constant 0 : i32
    return %c0_i32, %c0_i32_0 : i32, i32
  }
  func.func @transform_5(%arg0: i32) -> (i32, i32) {
    %c0_i32 = arith.constant 0 : i32
    %c0_i32_0 = arith.constant 0 : i32
    %c0_i32_1 = arith.constant 0 : i32
    return %c0_i32, %c0_i32_0 : i32, i32
  }
  func.func @transform_6(%arg0: i32) -> (i32, i32) {
    %c0_i32 = arith.constant 0 : i32
    %c0_i32_0 = arith.constant 0 : i32
    %c0_i32_1 = arith.constant 0 : i32
    return %c0_i32, %c0_i32_0 : i32, i32
  }
  func.func @transform_7(%arg0: i32) -> (i32, i32) {
    %c0_i32 = arith.constant 0 : i32
    %c0_i32_0 = arith.constant 0 : i32
    %c0_i32_1 = arith.constant 0 : i32
    return %c0_i32, %c0_i32_0 : i32, i32
  }
  func.func @transform_8(%arg0: i32) -> (i32, i32) {
    %c0_i32 = arith.constant 0 : i32
    %c0_i32_0 = arith.constant 0 : i32
    %c0_i32_1 = arith.constant 0 : i32
    return %c0_i32, %c0_i32_0 : i32, i32
  }
  func.func @transform_9(%arg0: i32) -> (i32, i32) {
    %c0_i32 = arith.constant 0 : i32
    %c0_i32_0 = arith.constant 0 : i32
    %c0_i32_1 = arith.constant 0 : i32
    return %c0_i32, %c0_i32_0 : i32, i32
  }
}

</mosaic_0001>

<llo_original>
// kernel: tpu_custom_call.1
$region0: #{tpu_custom_call.1}
  #allocation0 [shape = 'u32[]', space=smem, size = 0x4, offset = 0x4, fixed_abs, tag = 'smem constant byte address 0x4 - core index']
  #allocation1 [shape = 'u32[144,128]{1,0:T(1,128)}', space=vmem, size = 0x12000, scoped, tag = 'internal scratch']
  %s0 = inlined_call_operand.vmem [shape: f32[56,32], index: 0, kind: input, shape index: {}]
  %s1 = inlined_call_operand.vmem [shape: f32[1,32], index: 1, kind: input, shape index: {}]
  %s2 = inlined_call_operand.vmem [shape: f32[1,32], index: 2, kind: input, shape index: {}]
  %s3 = inlined_call_operand.vmem [shape: bf16[32,512], index: 3, kind: input, shape index: {}]
  %s4 = inlined_call_operand.vmem [shape: f32[1,512], index: 4, kind: input, shape index: {}]
  %s5 = inlined_call_operand.hbm [shape: bf16[512,128], index: 5, kind: input, shape index: {}]
  %s6 = inlined_call_operand.vmem [shape: f32[1,128], index: 6, kind: input, shape index: {}]
  %s7 = inlined_call_operand.hbm [shape: bf16[128,128], index: 7, kind: input, shape index: {}]
  %s8 = inlined_call_operand.vmem [shape: f32[1,128], index: 8, kind: input, shape index: {}]
  %s9 = inlined_call_operand.hbm [shape: bf16[56,128], index: 9, kind: output, shape index: {}]
  %s10 = sld [smem:[#allocation0]]
  $region54: #{tpu_custom_call.1} parent=0
    _
  %s12 = ssub.s32 1, %s10
  %s13 = scalar_select 0, %s12, %s10
  $region1: #{tpu_custom_call.1} parent=0
    #allocation2 [shape = 'u8[131072]{0}', space=vmem, size = 0x20000, scoped, tag = 'input window, operand 5, single buffered']
    #allocation3 [shape = 's32[1]{0}', space=sflag, size = 0x4, scoped, tag = 'scoped memory for tpu_custom_call.1']
    #allocation4 [shape = 's32[1]{0}', space=sflag, size = 0x4, scoped, tag = 'scoped memory for tpu_custom_call.1']
    #allocation5 [shape = 'u8[32768]{0}', space=vmem, size = 0x8000, scoped, tag = 'input window, operand 7, single buffered']
    #allocation6 [shape = 's32[1]{0}', space=sflag, size = 0x4, scoped, tag = 'scoped memory for tpu_custom_call.1']
    #allocation7 [shape = 'u8[14336]{0}', space=vmem, size = 0x3800, scoped, tag = 'output window, operand 0, single buffered']
    %14 = vsyncpa [#allocation3], 0
    %15 = vsyncpa [#allocation6], 0
    %16 = vsyncpa [#allocation4], 0
    // Predicated region
    $region2: #{tpu_custom_call.1} parent=1 // pred_check
      _
    $region3: #{tpu_custom_call.1} parent=1 // pred_check_branch
      %18 = sbr.rel (0) target = $region5
    $region4: #{tpu_custom_call.1} parent=1 // pred_region
      _
    $region5: #{tpu_custom_call.1} parent=1 // pred_fallthru
      _
    // Predicated region
    $region6: #{tpu_custom_call.1} parent=1 // pred_check
      _
    $region7: #{tpu_custom_call.1} parent=1 // pred_check_branch
      %20 = sbr.rel (0) target = $region9
    $region8: #{tpu_custom_call.1} parent=1 // pred_region
      _
    $region9: #{tpu_custom_call.1} parent=1 // pred_fallthru
      _
    // Predicated region
    $region10: #{tpu_custom_call.1} parent=1 // pred_check
      _
    $region11: #{tpu_custom_call.1} parent=1 // pred_check_branch
      %22 = sbr.rel (0) target = $region13
    $region12: #{tpu_custom_call.1} parent=1 // pred_region
      _
    $region13: #{tpu_custom_call.1} parent=1 // pred_fallthru
      _
    // Predicated region
    $region14: #{tpu_custom_call.1} parent=1 // pred_check
      _
    $region15: #{tpu_custom_call.1} parent=1 // pred_check_branch
      %24 = sbr.rel (0) target = $region17
    $region16: #{tpu_custom_call.1} parent=1 // pred_region
      _
    $region17: #{tpu_custom_call.1} parent=1 // pred_fallthru
      _
    // Predicated region
    $region18: #{tpu_custom_call.1} parent=1 // pred_check
      _
    $region19: #{tpu_custom_call.1} parent=1 // pred_check_branch
      %26 = sbr.rel (0) target = $region21
    $region20: #{tpu_custom_call.1} parent=1 // pred_region
      _
    $region21: #{tpu_custom_call.1} parent=1 // pred_fallthru
      _
    // Predicated region
    $region22: #{tpu_custom_call.1} parent=1 // pred_check
      _
    $region23: #{tpu_custom_call.1} parent=1 // pred_check_branch
      %28 = sbr.rel (0) target = $region25
    $region24: #{tpu_custom_call.1} parent=1 // pred_region
      %s30 = ssub.s32 4096, 4096
      %31 = vsyncadd [#allocation3], %s30
      %s32 = sshll.u32 [#allocation2], 4
      %s33 = int_to_ptr.vmem [resolvable:$true] %s32
      %38 = dma.hbm_to_vmem [thread:$0]  %s5, 4096, %s33, [#allocation3], 64, 64, 4
    $region25: #{tpu_custom_call.1} parent=1 // pred_fallthru
      _
    // Predicated region
    $region26: #{tpu_custom_call.1} parent=1 // pred_check
      _
    $region27: #{tpu_custom_call.1} parent=1 // pred_check_branch
      %40 = sbr.rel (0) target = $region29
    $region28: #{tpu_custom_call.1} parent=1 // pred_region
      _
    $region29: #{tpu_custom_call.1} parent=1 // pred_fallthru
      _
    // Predicated region
    $region30: #{tpu_custom_call.1} parent=1 // pred_check
      _
    $region31: #{tpu_custom_call.1} parent=1 // pred_check_branch
      %42 = sbr.rel (0) target = $region33
    $region32: #{tpu_custom_call.1} parent=1 // pred_region
      %s44 = ssub.s32 1024, 1024
      %45 = vsyncadd [#allocation6], %s44
      %s46 = sshll.u32 [#allocation5], 4
      %s47 = int_to_ptr.vmem [resolvable:$true] %s46
      %52 = dma.hbm_to_vmem [thread:$0]  %s7, 1024, %s47, [#allocation6], 64, 64, 4
    $region33: #{tpu_custom_call.1} parent=1 // pred_fallthru
      _
    // Predicated region
    $region34: #{tpu_custom_call.1} parent=1 // pred_check
      _
    $region35: #{tpu_custom_call.1} parent=1 // pred_check_branch
      %54 = sbr.rel (0) target = $region37
    $region36: #{tpu_custom_call.1} parent=1 // pred_region
      _
    $region37: #{tpu_custom_call.1} parent=1 // pred_fallthru
      _
    // Predicated region
    $region38: #{tpu_custom_call.1} parent=1 // pred_check
      _
    $region39: #{tpu_custom_call.1} parent=1 // pred_check_branch
      %56 = sbr.rel (0) target = $region41
    $region40: #{tpu_custom_call.1} parent=1 // pred_region
      %57 = dma.done [#allocation3], 4096
    $region41: #{tpu_custom_call.1} parent=1 // pred_fallthru
      _
    // Predicated region
    $region42: #{tpu_custom_call.1} parent=1 // pred_check
      _
    $region43: #{tpu_custom_call.1} parent=1 // pred_check_branch
      %59 = sbr.rel (0) target = $region45
    $region44: #{tpu_custom_call.1} parent=1 // pred_region
      %60 = dma.done [#allocation6], 1024
    $region45: #{tpu_custom_call.1} parent=1 // pred_fallthru
      _
    %v62 = vld [vmem:[%s0] sm:$0xff]
    %v63 = vld [vmem:[%s0 + $0x8] sm:$0xff]
    %v64 = vld [vmem:[%s0 + $0x10] sm:$0xff]
    %v65 = vld [vmem:[%s0 + $0x18] sm:$0xff]
    %v66 = vld [vmem:[%s0 + $0x20] sm:$0xff]
    %v67 = vld [vmem:[%s0 + $0x28] sm:$0xff]
    %v68 = vld [vmem:[%s0 + $0x30] sm:$0xff]
    %v69 = vlaneseq
    %v70 = vshrl.u32 %v69, 7
    %v71 = vadd.s32 %v70, 8
    %v72 = vadd.s32 %v70, 16
    %v73 = vadd.s32 %v70, 24
    %v74 = vadd.s32 %v70, 32
    %v75 = vadd.s32 %v70, 40
    %v76 = vadd.s32 %v70, 48
    %vm77 = vcmp.lt.s32.totalorder %v70, 52
    %vm78 = vcmp.lt.s32.totalorder %v71, 52
    %vm79 = vcmp.lt.s32.totalorder %v72, 52
    %vm80 = vcmp.lt.s32.totalorder %v73, 52
    %vm81 = vcmp.lt.s32.totalorder %v74, 52
    %vm82 = vcmp.lt.s32.totalorder %v75, 52
    %vm83 = vcmp.lt.s32.totalorder %v76, 52
    %v84 = vsel %vm77, 1, 0
    %v85 = vsel %vm78, 1, 0
    %v86 = vsel %vm79, 1, 0
    %v87 = vsel %vm80, 1, 0
    %v88 = vsel %vm81, 1, 0
    %v89 = vsel %vm82, 1, 0
    %v90 = vsel %vm83, 1, 0
    %v91 = vcvt.s32.f32 %v84
    %v92 = vcvt.s32.f32 %v85
    %v93 = vcvt.s32.f32 %v86
    %v94 = vcvt.s32.f32 %v87
    %v95 = vcvt.s32.f32 %v88
    %v96 = vcvt.s32.f32 %v89
    %v97 = vcvt.s32.f32 %v90
    %vm98 = vcmask 261120
    %v99 = vsel %vm98, %v62, 0.0
    %v100 = vsel %vm98, %v63, 0.0
    %v101 = vadd.f32 %v99, %v100
    %v102 = vsel %vm98, %v64, 0.0
    %v103 = vadd.f32 %v101, %v102
    %v104 = vsel %vm98, %v65, 0.0
    %v105 = vadd.f32 %v103, %v104
    %v106 = vsel %vm98, %v66, 0.0
    %v107 = vadd.f32 %v105, %v106
    %v108 = vsel %vm98, %v67, 0.0
    %v109 = vadd.f32 %v107, %v108
    %v110 = vsel %vm98, %v68, 0.0
    %v111 = vadd.f32 %v109, %v110
    %v112 = vrot.slane %v111, 4
    %v113 = vadd.f32 %v111, %v112
    %v114 = vrot.slane %v113, 2
    %v115 = vadd.f32 %v113, %v114
    %v116 = vrot.slane %v115, 1
    %v117 = vadd.f32 %v115, %v116
    %v118 = vmul.f32 %v117, 0.01923077
    %v119 = vsub.f32 %v62, %v118
    %v120 = vsub.f32 %v63, %v118
    %v121 = vsub.f32 %v64, %v118
    %v122 = vsub.f32 %v65, %v118
    %v123 = vsub.f32 %v66, %v118
    %v124 = vsub.f32 %v67, %v118
    %v125 = vsub.f32 %v68, %v118
    %v126 = vmul.f32 %v119, %v91
    %v127 = vmul.f32 %v120, %v92
    %v128 = vmul.f32 %v121, %v93
    %v129 = vmul.f32 %v122, %v94
    %v130 = vmul.f32 %v123, %v95
    %v131 = vmul.f32 %v124, %v96
    %v132 = vmul.f32 %v125, %v97
    %v133 = vmul.f32 %v126, %v126
    %v134 = vmul.f32 %v127, %v127
    %v135 = vmul.f32 %v128, %v128
    %v136 = vmul.f32 %v129, %v129
    %v137 = vmul.f32 %v130, %v130
    %v138 = vmul.f32 %v131, %v131
    %v139 = vmul.f32 %v132, %v132
    %v140 = vsel %vm98, %v133, 0.0
    %v141 = vsel %vm98, %v134, 0.0
    %v142 = vadd.f32 %v140, %v141
    %v143 = vsel %vm98, %v135, 0.0
    %v144 = vadd.f32 %v142, %v143
    %v145 = vsel %vm98, %v136, 0.0
    %v146 = vadd.f32 %v144, %v145
    %v147 = vsel %vm98, %v137, 0.0
    %v148 = vadd.f32 %v146, %v147
    %v149 = vsel %vm98, %v138, 0.0
    %v150 = vadd.f32 %v148, %v149
    %v151 = vsel %vm98, %v139, 0.0
    %v152 = vadd.f32 %v150, %v151
    %v153 = vrot.slane %v152, 4
    %v154 = vadd.f32 %v152, %v153
    %v155 = vrot.slane %v154, 2
    %v156 = vadd.f32 %v154, %v155
    %v157 = vrot.slane %v156, 1
    %v158 = vadd.f32 %v156, %v157
    %v159 = vmul.f32 %v158, 0.01923077
    %v160 = vadd.f32 %v159, 1e-05
    %v161 = vrsqrt.pop %v160
    %v162 = vld [vmem:[%s1] sm:$0x1]
    %v163 = vmul.f32 %v162, %v161
    %v164 = vld [vmem:[%s2] sm:$0x1]
    %v165 = vmul.f32 %v118, %v163
    %v166 = vsub.f32 %v164, %v165
    %v168 = vlaneseq
    %v169 = vshrl.u32 %v168, 7
    %v170 = vsub.s32 0, %v169
    %v171 = vrot.slane %v163, %v170
    %v173 = vmul.f32 %v62, %v171
    %v174 = vmul.f32 %v63, %v171
    %v175 = vmul.f32 %v64, %v171
    %v176 = vmul.f32 %v65, %v171
    %v177 = vmul.f32 %v66, %v171
    %v178 = vmul.f32 %v67, %v171
    %v179 = vmul.f32 %v68, %v171
    %v181 = vlaneseq
    %v182 = vshrl.u32 %v181, 7
    %v183 = vsub.s32 0, %v182
    %v184 = vrot.slane %v166, %v183
    %v186 = vadd.f32 %v173, %v184
    %v187 = vadd.f32 %v174, %v184
    %v188 = vadd.f32 %v175, %v184
    %v189 = vadd.f32 %v176, %v184
    %v190 = vadd.f32 %v177, %v184
    %v191 = vadd.f32 %v178, %v184
    %v192 = vadd.f32 %v179, %v184
    %v193 = vpack.c.bf16 %v187, %v186
    %v194 = vpack.c.bf16 %v189, %v188
    %v195 = vpack.c.bf16 %v191, %v190
    %v196 = vpack.c.bf16 %v192, %v192
    %v197 = vld [vmem:[%s3] sm:$0xff]
    %v198 = vld [vmem:[%s3 + $0x8] sm:$0xff]
    %v199 = vld [vmem:[%s3 + $0x10] sm:$0xff]
    %v200 = vld [vmem:[%s3 + $0x18] sm:$0xff]
    %v201 = vld [vmem:[%s3 + $0x20] sm:$0xff]
    %v202 = vld [vmem:[%s3 + $0x28] sm:$0xff]
    %v203 = vld [vmem:[%s3 + $0x30] sm:$0xff]
    %v204 = vld [vmem:[%s3 + $0x38] sm:$0xff]
    %v205 = vld [vmem:[%s4] sm:$0xf]
    %v206 = vld [vmem:[#allocation2] sm:$0xf]
    %v207 = vld [vmem:[#allocation2 + $0x4] sm:$0xf]
    %v208 = vld [vmem:[#allocation2 + $0x8] sm:$0xf]
    %v209 = vld [vmem:[#allocation2 + $0xc] sm:$0xf]
    %v210 = vld [vmem:[#allocation2 + $0x10] sm:$0xf]
    %v211 = vld [vmem:[#allocation2 + $0x14] sm:$0xf]
    %v212 = vld [vmem:[#allocation2 + $0x18] sm:$0xf]
    %v213 = vld [vmem:[#allocation2 + $0x1c] sm:$0xf]
    %v214 = vld [vmem:[#allocation2 + $0x20] sm:$0xf]
    %v215 = vld [vmem:[#allocation2 + $0x24] sm:$0xf]
    %v216 = vld [vmem:[#allocation2 + $0x28] sm:$0xf]
    %v217 = vld [vmem:[#allocation2 + $0x2c] sm:$0xf]
    %v218 = vld [vmem:[#allocation2 + $0x30] sm:$0xf]
    %v219 = vld [vmem:[#allocation2 + $0x34] sm:$0xf]
    %v220 = vld [vmem:[#allocation2 + $0x38] sm:$0xf]
    %v221 = vld [vmem:[#allocation2 + $0x3c] sm:$0xf]
    %v222 = vld [vmem:[#allocation2 + $0x40] sm:$0xf]
    %v223 = vld [vmem:[#allocation2 + $0x44] sm:$0xf]
    %v224 = vld [vmem:[#allocation2 + $0x48] sm:$0xf]
    %v225 = vld [vmem:[#allocation2 + $0x4c] sm:$0xf]
    %v226 = vld [vmem:[#allocation2 + $0x50] sm:$0xf]
    %v227 = vld [vmem:[#allocation2 + $0x54] sm:$0xf]
    %v228 = vld [vmem:[#allocation2 + $0x58] sm:$0xf]
    %v229 = vld [vmem:[#allocation2 + $0x5c] sm:$0xf]
    %v230 = vld [vmem:[#allocation2 + $0x60] sm:$0xf]
    %v231 = vld [vmem:[#allocation2 + $0x64] sm:$0xf]
    %v232 = vld [vmem:[#allocation2 + $0x68] sm:$0xf]
    %v233 = vld [vmem:[#allocation2 + $0x6c] sm:$0xf]
    %v234 = vld [vmem:[#allocation2 + $0x70] sm:$0xf]
    %v235 = vld [vmem:[#allocation2 + $0x74] sm:$0xf]
    %v236 = vld [vmem:[#allocation2 + $0x78] sm:$0xf]
    %v237 = vld [vmem:[#allocation2 + $0x7c] sm:$0xf]
    %v238 = vld [vmem:[#allocation2 + $0x80] sm:$0xf]
    %v239 = vld [vmem:[#allocation2 + $0x84] sm:$0xf]
    %v240 = vld [vmem:[#allocation2 + $0x88] sm:$0xf]
    %v241 = vld [vmem:[#allocation2 + $0x8c] sm:$0xf]
    %v242 = vld [vmem:[#allocation2 + $0x90] sm:$0xf]
    %v243 = vld [vmem:[#allocation2 + $0x94] sm:$0xf]
    %v244 = vld [vmem:[#allocation2 + $0x98] sm:$0xf]
    %v245 = vld [vmem:[#allocation2 + $0x9c] sm:$0xf]
    %v246 = vld [vmem:[#allocation2 + $0xa0] sm:$0xf]
    %v247 = vld [vmem:[#allocation2 + $0xa4] sm:$0xf]
    %v248 = vld [vmem:[#allocation2 + $0xa8] sm:$0xf]
    %v249 = vld [vmem:[#allocation2 + $0xac] sm:$0xf]
    %v250 = vld [vmem:[#allocation2 + $0xb0] sm:$0xf]
    %v251 = vld [vmem:[#allocation2 + $0xb4] sm:$0xf]
    %v252 = vld [vmem:[#allocation2 + $0xb8] sm:$0xf]
    %v253 = vld [vmem:[#allocation2 + $0xbc] sm:$0xf]
    %v254 = vld [vmem:[#allocation2 + $0xc0] sm:$0xf]
    %v255 = vld [vmem:[#allocation2 + $0xc4] sm:$0xf]
    %v256 = vld [vmem:[#allocation2 + $0xc8] sm:$0xf]
    %v257 = vld [vmem:[#allocation2 + $0xcc] sm:$0xf]
    %v258 = vld [vmem:[#allocation2 + $0xd0] sm:$0xf]
    %v259 = vld [vmem:[#allocation2 + $0xd4] sm:$0xf]
    %v260 = vld [vmem:[#allocation2 + $0xd8] sm:$0xf]
    %v261 = vld [vmem:[#allocation2 + $0xdc] sm:$0xf]
    %v262 = vld [vmem:[#allocation2 + $0xe0] sm:$0xf]
    %v263 = vld [vmem:[#allocation2 + $0xe4] sm:$0xf]
    %v264 = vld [vmem:[#allocation2 + $0xe8] sm:$0xf]
    %v265 = vld [vmem:[#allocation2 + $0xec] sm:$0xf]
    %v266 = vld [vmem:[#allocation2 + $0xf0] sm:$0xf]
    %v267 = vld [vmem:[#allocation2 + $0xf4] sm:$0xf]
    %v268 = vld [vmem:[#allocation2 + $0xf8] sm:$0xf]
    %v269 = vld [vmem:[#allocation2 + $0xfc] sm:$0xf]
    %v270 = vld [vmem:[%s6] sm:$0x1]
    %v271 = vld [vmem:[#allocation5] sm:$0xf]
    %v272 = vld [vmem:[#allocation5 + $0x4] sm:$0xf]
    %v273 = vld [vmem:[#allocation5 + $0x8] sm:$0xf]
    %v274 = vld [vmem:[#allocation5 + $0xc] sm:$0xf]
    %v275 = vld [vmem:[#allocation5 + $0x10] sm:$0xf]
    %v276 = vld [vmem:[#allocation5 + $0x14] sm:$0xf]
    %v277 = vld [vmem:[#allocation5 + $0x18] sm:$0xf]
    %v278 = vld [vmem:[#allocation5 + $0x1c] sm:$0xf]
    %v279 = vld [vmem:[#allocation5 + $0x20] sm:$0xf]
    %v280 = vld [vmem:[#allocation5 + $0x24] sm:$0xf]
    %v281 = vld [vmem:[#allocation5 + $0x28] sm:$0xf]
    %v282 = vld [vmem:[#allocation5 + $0x2c] sm:$0xf]
    %v283 = vld [vmem:[#allocation5 + $0x30] sm:$0xf]
    %v284 = vld [vmem:[#allocation5 + $0x34] sm:$0xf]
    %v285 = vld [vmem:[#allocation5 + $0x38] sm:$0xf]
    %v286 = vld [vmem:[#allocation5 + $0x3c] sm:$0xf]
    %v287 = vld [vmem:[%s8] sm:$0x1]
    %v289 = vlaneseq
    %v290 = vshrl.u32 %v289, 7
    %v291 = vsub.s32 0, %v290
    %v292 = vrot.slane %v205, %v291
    %v293 = vlaneseq
    %v294 = vshrl.u32 %v293, 7
    %v295 = vsub.s32 1, %v294
    %v296 = vrot.slane %v205, %v295
    %v297 = vlaneseq
    %v298 = vshrl.u32 %v297, 7
    %v299 = vsub.s32 2, %v298
    %v300 = vrot.slane %v205, %v299
    %v301 = vlaneseq
    %v302 = vshrl.u32 %v301, 7
    %v303 = vsub.s32 3, %v302
    %v304 = vrot.slane %v205, %v303
    %v317 = vunpack.c.l.b16 %v197
    %v318 = vunpack.c.h.b16 %v197
    %v319 = vunpack.c.l.b16 %v198
    %v320 = vunpack.c.h.b16 %v198
    %v321 = vunpack.c.l.b16 %v199
    %v322 = vunpack.c.h.b16 %v199
    %v323 = vunpack.c.l.b16 %v200
    %v324 = vunpack.c.h.b16 %v200
    %v325 = vunpack.c.l.b16 %v201
    %v326 = vunpack.c.h.b16 %v201
    %v327 = vunpack.c.l.b16 %v202
    %v328 = vunpack.c.h.b16 %v202
    %v329 = vunpack.c.l.b16 %v203
    %v330 = vunpack.c.h.b16 %v203
    %v331 = vunpack.c.l.b16 %v204
    %v332 = vunpack.c.h.b16 %v204
    %v333 = vpack.c.b16 %v321, %v317
    %v334 = vpack.c.b16 %v322, %v318
    %v335 = vpack.c.b16 %v323, %v319
    %v336 = vpack.c.b16 %v324, %v320
    %v337 = vpack.c.b16 %v329, %v325
    %v338 = vpack.c.b16 %v330, %v326
    %v339 = vpack.c.b16 %v331, %v327
    %v340 = vpack.c.b16 %v332, %v328
    %v350 = vsel %vm98, %v193, 0
    %v353 = vsel %vm98, %v194, 0
    %v356 = vsel %vm98, %v195, 0
    %v359 = vsel %vm98, %v196, 0
    %361 = vmatprep.subr.bf16.mxu0 %v334
    %362 = vmatpush1.bf16.msra.mxu0 %v333
    %363 = vmatprep.subr.bf16.mxu0 %v338
    %364 = vmatpush1.bf16.msra.mxu0 %v337
    %365 = vmatprep.subr.bf16.mxu0 0
    %366 = vmatpush1.bf16.msra.mxu0 0
    %367 = vmatprep.subr.bf16.mxu0 0
    %368 = vmatpush1.bf16.msra.mxu0 0
    %369 = vmatprep.subr.bf16.mxu0 0
    %370 = vmatpush1.bf16.msra.mxu0 0
    %371 = vmatprep.subr.bf16.mxu0 0
    %372 = vmatpush1.bf16.msra.mxu0 0
    %373 = vmatprep.subr.bf16.mxu0 0
    %374 = vmatpush1.bf16.msra.mxu0 0
    %375 = vmatprep.subr.bf16.mxu0 0
    %376 = vmatpush1.bf16.msra.mxu0 0
    %377 = vmatprep.subr.bf16.mxu0 0
    %378 = vmatpush1.bf16.msra.mxu0 0
    %379 = vmatprep.subr.bf16.mxu0 0
    %380 = vmatpush1.bf16.msra.mxu0 0
    %381 = vmatprep.subr.bf16.mxu0 0
    %382 = vmatpush1.bf16.msra.mxu0 0
    %383 = vmatprep.subr.bf16.mxu0 0
    %384 = vmatpush1.bf16.msra.mxu0 0
    %385 = vmatprep.subr.bf16.mxu0 0
    %386 = vmatpush1.bf16.msra.mxu0 0
    %387 = vmatprep.subr.bf16.mxu0 0
    %388 = vmatpush1.bf16.msra.mxu0 0
    %389 = vmatprep.subr.bf16.mxu0 0
    %390 = vmatpush1.bf16.msra.mxu0 0
    %391 = vmatprep.subr.bf16.mxu0 0
    %392 = vmatpush1.bf16.msra.mxu0 0
    %393 = vmatprep.mubr.bf16.mxu0 0
    %394 = vmatmul.mubr.bf16.gmra.mrb[0].mxu0 %v350
    %v395 = vpop.f32.mrb[0].mxu0
    %v396 = vadd.f32 %v292, %v395
    %v397 = vpop.f32.mrb[0].mxu0
    %v398 = vadd.f32 %v296, %v397
    %v399 = vpop.f32.mrb[0].mxu0
    %v400 = vadd.f32 %v292, %v399
    %v401 = vpop.f32.mrb[0].mxu0
    %v402 = vadd.f32 %v296, %v401
    %403 = vmatprep.mubr.bf16.mxu0 0
    %404 = vmatmul.mubr.bf16.gmra.mrb[0].mxu0 %v353
    %v405 = vpop.f32.mrb[0].mxu0
    %v406 = vadd.f32 %v292, %v405
    %v407 = vpop.f32.mrb[0].mxu0
    %v408 = vadd.f32 %v296, %v407
    %v409 = vpop.f32.mrb[0].mxu0
    %v410 = vadd.f32 %v292, %v409
    %v411 = vpop.f32.mrb[0].mxu0
    %v412 = vadd.f32 %v296, %v411
    %413 = vmatprep.mubr.bf16.mxu0 0
    %414 = vmatmul.mubr.bf16.gmra.mrb[0].mxu0 %v356
    %v415 = vpop.f32.mrb[0].mxu0
    %v416 = vadd.f32 %v292, %v415
    %v417 = vpop.f32.mrb[0].mxu0
    %v418 = vadd.f32 %v296, %v417
    %v419 = vpop.f32.mrb[0].mxu0
    %v420 = vadd.f32 %v292, %v419
    %v421 = vpop.f32.mrb[0].mxu0
    %v422 = vadd.f32 %v296, %v421
    %423 = vmatprep.mubr.bf16.mxu0 0
    %424 = vmatmul.mubr.bf16.gmra.mrb[0].mxu0 %v359
    %v425 = vpop.f32.mrb[0].mxu0
    %v426 = vadd.f32 %v292, %v425
    %v427 = vpop.f32.mrb[0].mxu0
    %v428 = vadd.f32 %v296, %v427
    %v429 = vpop.f32.mrb[0].mxu0
    %v430 = vpop.f32.mrb[0].mxu0
    %431 = vdwg.mxu0
    %432 = vmatprep.subr.bf16.mxu0 %v336
    %433 = vmatpush1.bf16.msra.mxu0 %v335
    %434 = vmatprep.subr.bf16.mxu0 %v340
    %435 = vmatpush1.bf16.msra.mxu0 %v339
    %436 = vmatprep.subr.bf16.mxu0 0
    %437 = vmatpush1.bf16.msra.mxu0 0
    %438 = vmatprep.subr.bf16.mxu0 0
    %439 = vmatpush1.bf16.msra.mxu0 0
    %440 = vmatprep.subr.bf16.mxu0 0
    %441 = vmatpush1.bf16.msra.mxu0 0
    %442 = vmatprep.subr.bf16.mxu0 0
    %443 = vmatpush1.bf16.msra.mxu0 0
    %444 = vmatprep.subr.bf16.mxu0 0
    %445 = vmatpush1.bf16.msra.mxu0 0
    %446 = vmatprep.subr.bf16.mxu0 0
    %447 = vmatpush1.bf16.msra.mxu0 0
    %448 = vmatprep.subr.bf16.mxu0 0
    %449 = vmatpush1.bf16.msra.mxu0 0
    %450 = vmatprep.subr.bf16.mxu0 0
    %451 = vmatpush1.bf16.msra.mxu0 0
    %452 = vmatprep.subr.bf16.mxu0 0
    %453 = vmatpush1.bf16.msra.mxu0 0
    %454 = vmatprep.subr.bf16.mxu0 0
    %455 = vmatpush1.bf16.msra.mxu0 0
    %456 = vmatprep.subr.bf16.mxu0 0
    %457 = vmatpush1.bf16.msra.mxu0 0
    %458 = vmatprep.subr.bf16.mxu0 0
    %459 = vmatpush1.bf16.msra.mxu0 0
    %460 = vmatprep.subr.bf16.mxu0 0
    %461 = vmatpush1.bf16.msra.mxu0 0
    %462 = vmatprep.subr.bf16.mxu0 0
    %463 = vmatpush1.bf16.msra.mxu0 0
    %464 = vmatprep.mubr.bf16.mxu0 0
    %465 = vmatmul.mubr.bf16.gmra.mrb[0].mxu0 %v350
    %v466 = vpop.f32.mrb[0].mxu0
    %v467 = vadd.f32 %v300, %v466
    %v468 = vpop.f32.mrb[0].mxu0
    %v469 = vadd.f32 %v304, %v468
    %v470 = vpop.f32.mrb[0].mxu0
    %v471 = vadd.f32 %v300, %v470
    %v472 = vpop.f32.mrb[0].mxu0
    %v473 = vadd.f32 %v304, %v472
    %474 = vmatprep.mubr.bf16.mxu0 0
    %475 = vmatmul.mubr.bf16.gmra.mrb[0].mxu0 %v353
    %v476 = vpop.f32.mrb[0].mxu0
    %v477 = vadd.f32 %v300, %v476
    %v478 = vpop.f32.mrb[0].mxu0
    %v479 = vadd.f32 %v304, %v478
    %v480 = vpop.f32.mrb[0].mxu0
    %v481 = vadd.f32 %v300, %v480
    %v482 = vpop.f32.mrb[0].mxu0
    %v483 = vadd.f32 %v304, %v482
    %484 = vmatprep.mubr.bf16.mxu0 0
    %485 = vmatmul.mubr.bf16.gmra.mrb[0].mxu0 %v356
    %v486 = vpop.f32.mrb[0].mxu0
    %v487 = vadd.f32 %v300, %v486
    %v488 = vpop.f32.mrb[0].mxu0
    %v489 = vadd.f32 %v304, %v488
    %v490 = vpop.f32.mrb[0].mxu0
    %v491 = vadd.f32 %v300, %v490
    %v492 = vpop.f32.mrb[0].mxu0
    %v493 = vadd.f32 %v304, %v492
    %494 = vmatprep.mubr.bf16.mxu0 0
    %495 = vmatmul.mubr.bf16.gmra.mrb[0].mxu0 %v359
    %v496 = vpop.f32.mrb[0].mxu0
    %v497 = vadd.f32 %v300, %v496
    %v498 = vpop.f32.mrb[0].mxu0
    %v499 = vadd.f32 %v304, %v498
    %v500 = vpop.f32.mrb[0].mxu0
    %v501 = vpop.f32.mrb[0].mxu0
    %502 = vdwg.mxu0
    %v503 = vmax.f32 %v396, 0.0
    %v504 = vmax.f32 %v398, 0.0
    %v505 = vmax.f32 %v467, 0.0
    %v506 = vmax.f32 %v469, 0.0
    %v507 = vmax.f32 %v400, 0.0
    %v508 = vmax.f32 %v402, 0.0
    %v509 = vmax.f32 %v471, 0.0
    %v510 = vmax.f32 %v473, 0.0
    %v511 = vmax.f32 %v406, 0.0
    %v512 = vmax.f32 %v408, 0.0
    %v513 = vmax.f32 %v477, 0.0
    %v514 = vmax.f32 %v479, 0.0
    %v515 = vmax.f32 %v410, 0.0
    %v516 = vmax.f32 %v412, 0.0
    %v517 = vmax.f32 %v481, 0.0
    %v518 = vmax.f32 %v483, 0.0
    %v519 = vmax.f32 %v416, 0.0
    %v520 = vmax.f32 %v418, 0.0
    %v521 = vmax.f32 %v487, 0.0
    %v522 = vmax.f32 %v489, 0.0
    %v523 = vmax.f32 %v420, 0.0
    %v524 = vmax.f32 %v422, 0.0
    %v525 = vmax.f32 %v491, 0.0
    %v526 = vmax.f32 %v493, 0.0
    %v527 = vmax.f32 %v426, 0.0
    %v528 = vmax.f32 %v428, 0.0
    %v529 = vmax.f32 %v497, 0.0
    %v530 = vmax.f32 %v499, 0.0
    %v531 = vpack.c.bf16 %v507, %v503
    %v532 = vpack.c.bf16 %v508, %v504
    %v533 = vpack.c.bf16 %v509, %v505
    %v534 = vpack.c.bf16 %v510, %v506
    %v535 = vpack.c.bf16 %v515, %v511
    %v536 = vpack.c.bf16 %v516, %v512
    %v537 = vpack.c.bf16 %v517, %v513
    %v538 = vpack.c.bf16 %v518, %v514
    %v539 = vpack.c.bf16 %v523, %v519
    %v540 = vpack.c.bf16 %v524, %v520
    %v541 = vpack.c.bf16 %v525, %v521
    %v542 = vpack.c.bf16 %v526, %v522
    %v543 = vpack.c.bf16 %v527, %v527
    %v544 = vpack.c.bf16 %v528, %v528
    %v545 = vpack.c.bf16 %v529, %v529
    %v546 = vpack.c.bf16 %v530, %v530
    %v548 = vlaneseq
    %v549 = vshrl.u32 %v548, 7
    %v550 = vsub.s32 0, %v549
    %v551 = vrot.slane %v270, %v550
    %v617 = vunpack.c.l.b16 %v206
    %v618 = vunpack.c.l.b16 %v207
    %v619 = vunpack.c.l.b16 %v208
    %v620 = vunpack.c.l.b16 %v209
    %v621 = vunpack.c.l.b16 %v210
    %v622 = vunpack.c.l.b16 %v211
    %v623 = vunpack.c.l.b16 %v212
    %v624 = vunpack.c.l.b16 %v213
    %v625 = vunpack.c.l.b16 %v214
    %v626 = vunpack.c.l.b16 %v215
    %v627 = vunpack.c.l.b16 %v216
    %v628 = vunpack.c.l.b16 %v217
    %v629 = vunpack.c.l.b16 %v218
    %v630 = vunpack.c.l.b16 %v219
    %v631 = vunpack.c.l.b16 %v220
    %v632 = vunpack.c.l.b16 %v221
    %v633 = vunpack.c.l.b16 %v222
    %v634 = vunpack.c.l.b16 %v223
    %v635 = vunpack.c.l.b16 %v224
    %v636 = vunpack.c.l.b16 %v225
    %v637 = vunpack.c.l.b16 %v226
    %v638 = vunpack.c.l.b16 %v227
    %v639 = vunpack.c.l.b16 %v228
    %v640 = vunpack.c.l.b16 %v229
    %v641 = vunpack.c.l.b16 %v230
    %v642 = vunpack.c.l.b16 %v231
    %v643 = vunpack.c.l.b16 %v232
    %v644 = vunpack.c.l.b16 %v233
    %v645 = vunpack.c.l.b16 %v234
    %v646 = vunpack.c.l.b16 %v235
    %v647 = vunpack.c.l.b16 %v236
    %v648 = vunpack.c.l.b16 %v237
    %v649 = vunpack.c.l.b16 %v238
    %v650 = vunpack.c.l.b16 %v239
    %v651 = vunpack.c.l.b16 %v240
    %v652 = vunpack.c.l.b16 %v241
    %v653 = vunpack.c.l.b16 %v242
    %v654 = vunpack.c.l.b16 %v243
    %v655 = vunpack.c.l.b16 %v244
    %v656 = vunpack.c.l.b16 %v245
    %v657 = vunpack.c.l.b16 %v246
    %v658 = vunpack.c.l.b16 %v247
    %v659 = vunpack.c.l.b16 %v248
    %v660 = vunpack.c.l.b16 %v249
    %v661 = vunpack.c.l.b16 %v250
    %v662 = vunpack.c.l.b16 %v251
    %v663 = vunpack.c.l.b16 %v252
    %v664 = vunpack.c.l.b16 %v253
    %v665 = vunpack.c.l.b16 %v254
    %v666 = vunpack.c.l.b16 %v255
    %v667 = vunpack.c.l.b16 %v256
    %v668 = vunpack.c.l.b16 %v257
    %v669 = vunpack.c.l.b16 %v258
    %v670 = vunpack.c.l.b16 %v259
    %v671 = vunpack.c.l.b16 %v260
    %v672 = vunpack.c.l.b16 %v261
    %v673 = vunpack.c.l.b16 %v262
    %v674 = vunpack.c.l.b16 %v263
    %v675 = vunpack.c.l.b16 %v264
    %v676 = vunpack.c.l.b16 %v265
    %v677 = vunpack.c.l.b16 %v266
    %v678 = vunpack.c.l.b16 %v267
    %v679 = vunpack.c.l.b16 %v268
    %v680 = vunpack.c.l.b16 %v269
    %v681 = vpack.c.b16 %v618, %v617
    %v682 = vpack.c.b16 %v620, %v619
    %v683 = vpack.c.b16 %v622, %v621
    %v684 = vpack.c.b16 %v624, %v623
    %v685 = vpack.c.b16 %v626, %v625
    %v686 = vpack.c.b16 %v628, %v627
    %v687 = vpack.c.b16 %v630, %v629
    %v688 = vpack.c.b16 %v632, %v631
    %v689 = vpack.c.b16 %v634, %v633
    %v690 = vpack.c.b16 %v636, %v635
    %v691 = vpack.c.b16 %v638, %v637
    %v692 = vpack.c.b16 %v640, %v639
    %v693 = vpack.c.b16 %v642, %v641
    %v694 = vpack.c.b16 %v644, %v643
    %v695 = vpack.c.b16 %v646, %v645
    %v696 = vpack.c.b16 %v648, %v647
    %v697 = vpack.c.b16 %v650, %v649
    %v698 = vpack.c.b16 %v652, %v651
    %v699 = vpack.c.b16 %v654, %v653
    %v700 = vpack.c.b16 %v656, %v655
    %v701 = vpack.c.b16 %v658, %v657
    %v702 = vpack.c.b16 %v660, %v659
    %v703 = vpack.c.b16 %v662, %v661
    %v704 = vpack.c.b16 %v664, %v663
    %v705 = vpack.c.b16 %v666, %v665
    %v706 = vpack.c.b16 %v668, %v667
    %v707 = vpack.c.b16 %v670, %v669
    %v708 = vpack.c.b16 %v672, %v671
    %v709 = vpack.c.b16 %v674, %v673
    %v710 = vpack.c.b16 %v676, %v675
    %v711 = vpack.c.b16 %v678, %v677
    %v712 = vpack.c.b16 %v680, %v679
    %745 = vmatprep.subr.bf16.mxu0 0
    %746 = vmatpush1.bf16.msra.mxu0 %v681
    %747 = vmatprep.subr.bf16.mxu0 0
    %748 = vmatpush1.bf16.msra.mxu0 %v682
    %749 = vmatprep.subr.bf16.mxu0 0
    %750 = vmatpush1.bf16.msra.mxu0 %v683
    %751 = vmatprep.subr.bf16.mxu0 0
    %752 = vmatpush1.bf16.msra.mxu0 %v684
    %753 = vmatprep.subr.bf16.mxu0 0
    %754 = vmatpush1.bf16.msra.mxu0 %v685
    %755 = vmatprep.subr.bf16.mxu0 0
    %756 = vmatpush1.bf16.msra.mxu0 %v686
    %757 = vmatprep.subr.bf16.mxu0 0
    %758 = vmatpush1.bf16.msra.mxu0 %v687
    %759 = vmatprep.subr.bf16.mxu0 0
    %760 = vmatpush1.bf16.msra.mxu0 %v688
    %761 = vmatprep.subr.bf16.mxu0 0
    %762 = vmatpush1.bf16.msra.mxu0 %v689
    %763 = vmatprep.subr.bf16.mxu0 0
    %764 = vmatpush1.bf16.msra.mxu0 %v690
    %765 = vmatprep.subr.bf16.mxu0 0
    %766 = vmatpush1.bf16.msra.mxu0 %v691
    %767 = vmatprep.subr.bf16.mxu0 0
    %768 = vmatpush1.bf16.msra.mxu0 %v692
    %769 = vmatprep.subr.bf16.mxu0 0
    %770 = vmatpush1.bf16.msra.mxu0 %v693
    %771 = vmatprep.subr.bf16.mxu0 0
    %772 = vmatpush1.bf16.msra.mxu0 %v694
    %773 = vmatprep.subr.bf16.mxu0 0
    %774 = vmatpush1.bf16.msra.mxu0 %v695
    %775 = vmatprep.subr.bf16.mxu0 0
    %776 = vmatpush1.bf16.msra.mxu0 %v696
    %777 = vmatprep.mubr.bf16.mxu0 %v532
    %778 = vmatmul.mubr.bf16.gmra.mrb[0].mxu0 %v531
    %v779 = vpop.f32.mrb[0].mxu0
    %v780 = vadd.f32 %v551, %v779
    %v781 = vpop.f32.mrb[0].mxu0
    %v782 = vpop.f32.mrb[0].mxu0
    %v783 = vadd.f32 %v551, %v782
    %v784 = vpop.f32.mrb[0].mxu0
    %785 = vmatprep.mubr.bf16.mxu0 %v536
    %786 = vmatmul.mubr.bf16.gmra.mrb[0].mxu0 %v535
    %v787 = vpop.f32.mrb[0].mxu0
    %v788 = vadd.f32 %v551, %v787
    %v789 = vpop.f32.mrb[0].mxu0
    %v790 = vpop.f32.mrb[0].mxu0
    %v791 = vadd.f32 %v551, %v790
    %v792 = vpop.f32.mrb[0].mxu0
    %793 = vmatprep.mubr.bf16.mxu0 %v540
    %794 = vmatmul.mubr.bf16.gmra.mrb[0].mxu0 %v539
    %v795 = vpop.f32.mrb[0].mxu0
    %v796 = vadd.f32 %v551, %v795
    %v797 = vpop.f32.mrb[0].mxu0
    %v798 = vpop.f32.mrb[0].mxu0
    %v799 = vadd.f32 %v551, %v798
    %v800 = vpop.f32.mrb[0].mxu0
    %801 = vmatprep.mubr.bf16.mxu0 %v544
    %802 = vmatmul.mubr.bf16.gmra.mrb[0].mxu0 %v543
    %v803 = vpop.f32.mrb[0].mxu0
    %v804 = vadd.f32 %v551, %v803
    %v805 = vpop.f32.mrb[0].mxu0
    %v806 = vpop.f32.mrb[0].mxu0
    %v807 = vpop.f32.mrb[0].mxu0
    %808 = vdwg.mxu0
    %809 = vmatprep.subr.bf16.mxu0 0
    %810 = vmatpush1.bf16.msra.mxu0 %v697
    %811 = vmatprep.subr.bf16.mxu0 0
    %812 = vmatpush1.bf16.msra.mxu0 %v698
    %813 = vmatprep.subr.bf16.mxu0 0
    %814 = vmatpush1.bf16.msra.mxu0 %v699
    %815 = vmatprep.subr.bf16.mxu0 0
    %816 = vmatpush1.bf16.msra.mxu0 %v700
    %817 = vmatprep.subr.bf16.mxu0 0
    %818 = vmatpush1.bf16.msra.mxu0 %v701
    %819 = vmatprep.subr.bf16.mxu0 0
    %820 = vmatpush1.bf16.msra.mxu0 %v702
    %821 = vmatprep.subr.bf16.mxu0 0
    %822 = vmatpush1.bf16.msra.mxu0 %v703
    %823 = vmatprep.subr.bf16.mxu0 0
    %824 = vmatpush1.bf16.msra.mxu0 %v704
    %825 = vmatprep.subr.bf16.mxu0 0
    %826 = vmatpush1.bf16.msra.mxu0 %v705
    %827 = vmatprep.subr.bf16.mxu0 0
    %828 = vmatpush1.bf16.msra.mxu0 %v706
    %829 = vmatprep.subr.bf16.mxu0 0
    %830 = vmatpush1.bf16.msra.mxu0 %v707
    %831 = vmatprep.subr.bf16.mxu0 0
    %832 = vmatpush1.bf16.msra.mxu0 %v708
    %833 = vmatprep.subr.bf16.mxu0 0
    %834 = vmatpush1.bf16.msra.mxu0 %v709
    %835 = vmatprep.subr.bf16.mxu0 0
    %836 = vmatpush1.bf16.msra.mxu0 %v710
    %837 = vmatprep.subr.bf16.mxu0 0
    %838 = vmatpush1.bf16.msra.mxu0 %v711
    %839 = vmatprep.subr.bf16.mxu0 0
    %840 = vmatpush1.bf16.msra.mxu0 %v712
    %841 = vmatprep.mubr.bf16.mxu0 %v534
    %842 = vmatmul.mubr.bf16.gmra.mrb[0].mxu0 %v533
    %v843 = vpop.f32.mrb[0].mxu0
    %v844 = vadd.f32 %v780, %v843
    %v845 = vpop.f32.mrb[0].mxu0
    %v846 = vpop.f32.mrb[0].mxu0
    %v847 = vadd.f32 %v783, %v846
    %v848 = vpop.f32.mrb[0].mxu0
    %849 = vmatprep.mubr.bf16.mxu0 %v538
    %850 = vmatmul.mubr.bf16.gmra.mrb[0].mxu0 %v537
    %v851 = vpop.f32.mrb[0].mxu0
    %v852 = vadd.f32 %v788, %v851
    %v853 = vpop.f32.mrb[0].mxu0
    %v854 = vpop.f32.mrb[0].mxu0
    %v855 = vadd.f32 %v791, %v854
    %v856 = vpop.f32.mrb[0].mxu0
    %857 = vmatprep.mubr.bf16.mxu0 %v542
    %858 = vmatmul.mubr.bf16.gmra.mrb[0].mxu0 %v541
    %v859 = vpop.f32.mrb[0].mxu0
    %v860 = vadd.f32 %v796, %v859
    %v861 = vpop.f32.mrb[0].mxu0
    %v862 = vpop.f32.mrb[0].mxu0
    %v863 = vadd.f32 %v799, %v862
    %v864 = vpop.f32.mrb[0].mxu0
    %865 = vmatprep.mubr.bf16.mxu0 %v546
    %866 = vmatmul.mubr.bf16.gmra.mrb[0].mxu0 %v545
    %v867 = vpop.f32.mrb[0].mxu0
    %v868 = vadd.f32 %v804, %v867
    %v869 = vpop.f32.mrb[0].mxu0
    %v870 = vpop.f32.mrb[0].mxu0
    %v871 = vpop.f32.mrb[0].mxu0
    %872 = vdwg.mxu0
    %v873 = vmax.f32 %v844, 0.0
    %v874 = vmax.f32 %v847, 0.0
    %v875 = vmax.f32 %v852, 0.0
    %v876 = vmax.f32 %v855, 0.0
    %v877 = vmax.f32 %v860, 0.0
    %v878 = vmax.f32 %v863, 0.0
    %v879 = vmax.f32 %v868, 0.0
    %v880 = vpack.c.bf16 %v874, %v873
    %v881 = vpack.c.bf16 %v876, %v875
    %v882 = vpack.c.bf16 %v878, %v877
    %v883 = vpack.c.bf16 %v879, %v879
    %v885 = vlaneseq
    %v886 = vshrl.u32 %v885, 7
    %v887 = vsub.s32 0, %v886
    %v888 = vrot.slane %v287, %v887
    %v906 = vunpack.c.l.b16 %v271
    %v907 = vunpack.c.l.b16 %v272
    %v908 = vunpack.c.l.b16 %v273
    %v909 = vunpack.c.l.b16 %v274
    %v910 = vunpack.c.l.b16 %v275
    %v911 = vunpack.c.l.b16 %v276
    %v912 = vunpack.c.l.b16 %v277
    %v913 = vunpack.c.l.b16 %v278
    %v914 = vunpack.c.l.b16 %v279
    %v915 = vunpack.c.l.b16 %v280
    %v916 = vunpack.c.l.b16 %v281
    %v917 = vunpack.c.l.b16 %v282
    %v918 = vunpack.c.l.b16 %v283
    %v919 = vunpack.c.l.b16 %v284
    %v920 = vunpack.c.l.b16 %v285
    %v921 = vunpack.c.l.b16 %v286
    %v922 = vpack.c.b16 %v907, %v906
    %v923 = vpack.c.b16 %v909, %v908
    %v924 = vpack.c.b16 %v911, %v910
    %v925 = vpack.c.b16 %v913, %v912
    %v926 = vpack.c.b16 %v915, %v914
    %v927 = vpack.c.b16 %v917, %v916
    %v928 = vpack.c.b16 %v919, %v918
    %v929 = vpack.c.b16 %v921, %v920
    %938 = vmatprep.subr.bf16.mxu0 0
    %939 = vmatpush1.bf16.msra.mxu0 %v922
    %940 = vmatprep.subr.bf16.mxu0 0
    %941 = vmatpush1.bf16.msra.mxu0 %v923
    %942 = vmatprep.subr.bf16.mxu0 0
    %943 = vmatpush1.bf16.msra.mxu0 %v924
    %944 = vmatprep.subr.bf16.mxu0 0
    %945 = vmatpush1.bf16.msra.mxu0 %v925
    %946 = vmatprep.subr.bf16.mxu0 0
    %947 = vmatpush1.bf16.msra.mxu0 %v926
    %948 = vmatprep.subr.bf16.mxu0 0
    %949 = vmatpush1.bf16.msra.mxu0 %v927
    %950 = vmatprep.subr.bf16.mxu0 0
    %951 = vmatpush1.bf16.msra.mxu0 %v928
    %952 = vmatprep.subr.bf16.mxu0 0
    %953 = vmatpush1.bf16.msra.mxu0 %v929
    %954 = vmatprep.subr.bf16.mxu0 0
    %955 = vmatpush1.bf16.msra.mxu0 0
    %956 = vmatprep.subr.bf16.mxu0 0
    %957 = vmatpush1.bf16.msra.mxu0 0
    %958 = vmatprep.subr.bf16.mxu0 0
    %959 = vmatpush1.bf16.msra.mxu0 0
    %960 = vmatprep.subr.bf16.mxu0 0
    %961 = vmatpush1.bf16.msra.mxu0 0
    %962 = vmatprep.subr.bf16.mxu0 0
    %963 = vmatpush1.bf16.msra.mxu0 0
    %964 = vmatprep.subr.bf16.mxu0 0
    %965 = vmatpush1.bf16.msra.mxu0 0
    %966 = vmatprep.subr.bf16.mxu0 0
    %967 = vmatpush1.bf16.msra.mxu0 0
    %968 = vmatprep.subr.bf16.mxu0 0
    %969 = vmatpush1.bf16.msra.mxu0 0
    %970 = vmatprep.mubr.bf16.mxu0 0
    %971 = vmatmul.mubr.bf16.gmra.mrb[0].mxu0 %v880
    %v972 = vpop.f32.mrb[0].mxu0
    %v973 = vadd.f32 %v888, %v972
    %v974 = vpop.f32.mrb[0].mxu0
    %v975 = vpop.f32.mrb[0].mxu0
    %v976 = vadd.f32 %v888, %v975
    %v977 = vpop.f32.mrb[0].mxu0
    %978 = vmatprep.mubr.bf16.mxu0 0
    %979 = vmatmul.mubr.bf16.gmra.mrb[0].mxu0 %v881
    %v980 = vpop.f32.mrb[0].mxu0
    %v981 = vadd.f32 %v888, %v980
    %v982 = vpop.f32.mrb[0].mxu0
    %v983 = vpop.f32.mrb[0].mxu0
    %v984 = vadd.f32 %v888, %v983
    %v985 = vpop.f32.mrb[0].mxu0
    %986 = vmatprep.mubr.bf16.mxu0 0
    %987 = vmatmul.mubr.bf16.gmra.mrb[0].mxu0 %v882
    %v988 = vpop.f32.mrb[0].mxu0
    %v989 = vadd.f32 %v888, %v988
    %v990 = vpop.f32.mrb[0].mxu0
    %v991 = vpop.f32.mrb[0].mxu0
    %v992 = vadd.f32 %v888, %v991
    %v993 = vpop.f32.mrb[0].mxu0
    %994 = vmatprep.mubr.bf16.mxu0 0
    %995 = vmatmul.mubr.bf16.gmra.mrb[0].mxu0 %v883
    %v996 = vpop.f32.mrb[0].mxu0
    %v997 = vadd.f32 %v888, %v996
    %v998 = vpop.f32.mrb[0].mxu0
    %v999 = vpop.f32.mrb[0].mxu0
    %v1000 = vpop.f32.mrb[0].mxu0
    %1001 = vdwg.mxu0
    %v1002 = vpack.c.bf16 %v976, %v973
    %v1003 = vpack.c.bf16 %v984, %v981
    %v1004 = vpack.c.bf16 %v992, %v989
    %v1005 = vpack.c.bf16 %v997, %v997
    %v1010 = vunpack.c.l.b16 %v1002
    %v1011 = vunpack.c.h.b16 %v1002
    %v1012 = vunpack.c.l.b16 %v1003
    %v1013 = vunpack.c.h.b16 %v1003
    %v1014 = vunpack.c.l.b16 %v1004
    %v1015 = vunpack.c.h.b16 %v1004
    %v1016 = vunpack.c.l.b16 %v1005
    %v1017 = vpack.c.b16 %v1010, %v1010
    %v1018 = vpack.c.b16 %v1011, %v1011
    %v1019 = vpack.c.b16 %v1012, %v1012
    %v1020 = vpack.c.b16 %v1013, %v1013
    %v1021 = vpack.c.b16 %v1014, %v1014
    %v1022 = vpack.c.b16 %v1015, %v1015
    %v1023 = vpack.c.b16 %v1016, %v1016
    %1031 = vst [vmem:[#allocation7] sm:$0xf] %v1017
    %1032 = vst [vmem:[#allocation7 + $0x4] sm:$0xf] %v1018
    %1033 = vst [vmem:[#allocation7 + $0x8] sm:$0xf] %v1019
    %1034 = vst [vmem:[#allocation7 + $0xc] sm:$0xf] %v1020
    %1035 = vst [vmem:[#allocation7 + $0x10] sm:$0xf] %v1021
    %1036 = vst [vmem:[#allocation7 + $0x14] sm:$0xf] %v1022
    %1037 = vst [vmem:[#allocation7 + $0x18] sm:$0xf] %v1023
    // Predicated region
    $region46: #{tpu_custom_call.1} parent=1 // pred_check
      _
    $region47: #{tpu_custom_call.1} parent=1 // pred_check_branch
      %1039 = sbr.rel (0) target = $region49
    $region48: #{tpu_custom_call.1} parent=1 // pred_region
      %s1041 = ssub.s32 448, 448
      %1042 = vsyncadd [#allocation4], %s1041
      %s1043 = sshll.u32 [#allocation7], 4
      %s1044 = int_to_ptr.vmem [resolvable:$true] %s1043
      %1049 = dma.vmem_to_hbm [thread:$0]  %s1044, 448, %s9, [#allocation4], 64, 64, 4
    $region49: #{tpu_custom_call.1} parent=1 // pred_fallthru
      _
    // Predicated region
    $region50: #{tpu_custom_call.1} parent=1 // pred_check
      _
    $region51: #{tpu_custom_call.1} parent=1 // pred_check_branch
      %1051 = sbr.rel (0) target = $region53
    $region52: #{tpu_custom_call.1} parent=1 // pred_region
      %1052 = dma.done [#allocation4], 448
    $region53: #{tpu_custom_call.1} parent=1 // pred_fallthru
      _
    %1053 = vsyncpa [#allocation3], 1
    %1054 = vsyncpa [#allocation6], 1
    %1055 = vsyncpa [#allocation4], 1

</llo_original>
